<compile_context>
chip_gen: v6e
topology: v6e:2x2x1
jax: 0.10.0
libtpu: 0.0.40
codegen_flags: <defaults>
</compile_context>

<pallas_src>
import functools

import jax
import jax.numpy as jnp
from jax.experimental import pallas as pl
from jax.experimental.pallas import tpu as pltpu


def _spatial_attention_kernel(*refs, H, W, ks, w_is_pow2):
    """One grid step: `Nb` images of shape (C, H*W), spatial axis on lanes.

    refs (in order):
      w_ref:    (2*ks*ks,) f32 in SMEM   -- conv weight, [in_ch, kh, kw] row-major.
      wcol_ref: (1, H*W)   i32 in VMEM   -- only present when W is NOT a power of 2.
      x_ref:    (Nb, C, H*W)             -- input block.
      o_ref:    (Nb, C, H*W)             -- output block.
    """
    if w_is_pow2:
        w_ref, x_ref, o_ref = refs
        wcol_ref = None
    else:
        w_ref, wcol_ref, x_ref, o_ref = refs

    HW = H * W
    r = ks // 2

    # ---- Hoisted, tap-independent values (computed once per grid step) --------
    pos = jax.lax.broadcasted_iota(jnp.int32, (1, HW), 1)   # flattened pixel index
    if w_is_pow2:
        wcol = pos & (W - 1)                                 # column index, (1, HW)
    else:
        wcol = wcol_ref[...]

    def h_mask(dh):
        if dh == 0:
            return None
        if dh < 0:
            return pos >= (-dh) * W       # first -dh rows have no (h+dh) neighbour
        return pos < (H - dh) * W         # last dh rows have no (h+dh) neighbour

    def w_mask(dw):
        if dw == 0:
            return None
        if dw < 0:
            return wcol >= -dw
        return wcol < (W - dw)

    taps = []                                               # (weight idx, roll amount, mask)
    for dh in range(-r, r + 1):
        hm = h_mask(dh)
        for dw in range(-r, r + 1):
            wm = w_mask(dw)
            if hm is None:
                mask = wm
            elif wm is None:
                mask = hm
            else:
                mask = hm & wm
            k = (dh + r) * ks + (dw + r)
            taps.append((k, (-(dh * W + dw)) % HW, mask))

    wvals = [w_ref[j] for j in range(2 * ks * ks)]          # scalar weights from SMEM

    # ---- Batch-vectorized block work ------------------------------------------
    x = x_ref[...].astype(jnp.float32)                      # (Nb, C, HW)
    avg = jnp.mean(x, axis=1)                               # (Nb, HW)  channel mean
    mx = jnp.max(x, axis=1)                                 # (Nb, HW)  channel max

    acc = jnp.zeros_like(avg)                               # (Nb, HW)
    for k, amt, mask in taps:
        # Mix the two conv input channels *before* shifting (roll is linear):
        # one XLU roll + one select per tap instead of two of each.
        mix = wvals[k] * avg + wvals[ks * ks + k] * mx      # (Nb, HW)
        if amt != 0:
            mix = pltpu.roll(mix, amt, axis=1)              # XLU lane rotation
        # (1, HW) masks broadcast over the Nb sublane axis.
        acc = acc + (mix if mask is None else jnp.where(mask, mix, 0.0))

    # sigmoid = 1 / (1 + exp(-acc)); exp and approx reciprocal both run on the EUP.
    att = pl.reciprocal(1.0 + jnp.exp(-acc), approx=True)   # (Nb, HW)
    o_ref[...] = (x * att[:, None, :]).astype(o_ref.dtype)  # broadcast over channels


def _pick_batch_block(N, C, HW, itemsize, target_block_bytes=2 << 20):
    """Largest divisor of N whose VMEM input block stays under ~2 MiB,
    preferring multiples of 8 (sublane fill of the (Nb, HW) intermediates),
    while keeping grid >= 2 when N >= 2 (v7x two-TensorCore sharding)."""
    sub_tile = max(1, 32 // itemsize)                 # 8 for f32, 16 for bf16
    c_pad = ((C + sub_tile - 1) // sub_tile) * sub_tile
    per_image = c_pad * HW * itemsize                 # VMEM bytes incl. sublane padding
    candidates = []
    for nb in range(1, N + 1):
        if N % nb:
            continue
        if N >= 2 and (N // nb) < 2:
            continue                                  # keep grid >= 2 for v7x megacore
        if nb > 1 and nb * per_image > target_block_bytes:
            continue
        candidates.append(nb)
    if not candidates:
        return 1
    mult8 = [nb for nb in candidates if nb % 8 == 0]
    return max(mult8) if mult8 else max(candidates)


def spatial_attention_forward(x_nchw, conv_weight, *, batch_block=None):
    """SpatialAttention forward.

    x_nchw:      (N, C, H, W)          (PyTorch NCHW layout; f32 or bf16).
    conv_weight: (1, 2, ks, ks) f32    (PyTorch OIHW layout, bias-free; ks odd).
    """
    N, C, H, W = x_nchw.shape
    _, two, ks, ks2 = conv_weight.shape
    assert two == 2 and ks == ks2 and ks % 2 == 1
    HW = H * W
    itemsize = jnp.dtype(x_nchw.dtype).itemsize

    Nb = _pick_batch_block(N, C, HW, itemsize) if batch_block is None else batch_block
    assert N % Nb == 0

    x2 = x_nchw.reshape(N, C, HW)                            # free reshape, lane-dense
    w_flat = conv_weight.reshape(-1).astype(jnp.float32)     # (2*ks*ks,)
    w_is_pow2 = (W & (W - 1)) == 0

    in_specs = [
        # Conv weights: a handful of scalars, kept in SMEM.
        pl.BlockSpec(memory_space=pltpu.MemorySpace.SMEM),
    ]
    operands = [w_flat]
    if not w_is_pow2:
        # Column-index table only needed when an in-kernel bitwise AND can't be used.
        wcol = jnp.tile(jnp.arange(W, dtype=jnp.int32), H).reshape(1, HW)
        in_specs.append(pl.BlockSpec((1, HW), lambda n: (0, 0)))
        operands.append(wcol)
    # Input images, spatial axis flattened onto lanes.
    in_specs.append(pl.BlockSpec((Nb, C, HW), lambda n: (n, 0, 0)))
    operands.append(x2)

    # Explicit scoped-VMEM budget: in+out blocks, double-buffered, plus f32
    # intermediates; raises v5e's 16 MiB default, stays well under v7x's 64 MiB.
    sub_tile = max(1, 32 // itemsize)
    c_pad = ((C + sub_tile - 1) // sub_tile) * sub_tile
    block_bytes = Nb * c_pad * HW * itemsize
    vmem_needed = 4 * block_bytes + 8 * Nb * HW * 4
    vmem_limit_bytes = int(min(48 << 20, max(32 << 20, 2 * vmem_needed)))

    kernel = functools.partial(
        _spatial_attention_kernel, H=H, W=W, ks=ks, w_is_pow2=w_is_pow2)

    out = pl.pallas_call(
        kernel,
        out_shape=jax.ShapeDtypeStruct((N, C, HW), x_nchw.dtype),
        grid_spec=pltpu.PrefetchScalarGridSpec(
            num_scalar_prefetch=0,
            grid=(N // Nb,),
            in_specs=in_specs,
            out_specs=pl.BlockSpec((Nb, C, HW), lambda n: (n, 0, 0)),
        ),
        compiler_params=pltpu.CompilerParams(
            # Batch axis is independent -> shardable across v7x's two TensorCores.
            dimension_semantics=("parallel",),
            vmem_limit_bytes=vmem_limit_bytes,
        ),
    )(*operands)
    return out.reshape(N, C, H, W)


def _reference(x_nchw, conv_weight):
    """Pure-JAX reference with the same semantics as the PyTorch module."""
    avg = jnp.mean(x_nchw, axis=1, keepdims=True)
    mx = jnp.max(x_nchw, axis=1, keepdims=True)
    att_in = jnp.concatenate([avg, mx], axis=1)              # (N, 2, H, W)
    att = jax.lax.conv_general_dilated(
        att_in, conv_weight, window_strides=(1, 1), padding="SAME",
        dimension_numbers=("NCHW", "OIHW", "NCHW"))
    return jax.nn.sigmoid(att) * x_nchw


if __name__ == "__main__":
    N, C, H, W = 2, 4, 16, 16
    key = jax.random.PRNGKey(0)
    kx, kw = jax.random.split(key)

    x = jax.random.normal(kx, (N, C, H, W), jnp.float32)           # NCHW, as in PyTorch
    conv_w = 0.3 * jax.random.normal(kw, (1, 2, 3, 3), jnp.float32)  # Conv2d(2,1,3,bias=False)

    out = spatial_attention_forward(x, conv_w)
    out = jax.block_until_ready(out)

    ref = _reference(x, conv_w)
    assert out.shape == (N, C, H, W)
    err = float(jnp.max(jnp.abs(out - ref)))
    # Tolerance relaxed vs. exact f32 because the sigmoid denominator uses the
    # EUP approximate reciprocal (pl.reciprocal(..., approx=True)).
    assert jnp.allclose(out, ref, atol=2e-3, rtol=2e-3), f"max abs err {err}"

    print("KERNEL_OK")
</pallas_src>

<mosaic_0001>
module attributes {stable_mosaic.version = 11 : i64} {
  func.func @_spatial_attention_kernel(%arg0: i32, %arg1: memref<18xf32, #tpu.memory_space<smem>>, %arg2: memref<1x4x256xf32, #tpu.memory_space<vmem>>, %arg3: memref<1x4x256xf32, #tpu.memory_space<vmem>>) attributes {dimension_semantics = [#tpu.dimension_semantics<parallel>], iteration_bounds = array<i64: 2>, scalar_prefetch = 0 : i64, scratch_operands = 0 : i64, tpu.core_type = #tpu.core_type<tc>, window_params = [{transform_indices = @transform_0, window_bounds = array<i64: 18>}, {transform_indices = @transform_1, window_bounds = array<i64: 1, 4, 256>}, {transform_indices = @transform_2, window_bounds = array<i64: 1, 4, 256>}]} {
    %0 = tpu.iota {dimensions = array<i32: 1>} : vector<1x256xi32>
    %c15_i32 = arith.constant 15 : i32
    %1 = vector.broadcast %c15_i32 : i32 to vector<1x256xi32>
    %2 = arith.andi %0, %1 : vector<1x256xi32>
    %c16_i32 = arith.constant 16 : i32
    %3 = vector.broadcast %c16_i32 : i32 to vector<1x256xi32>
    %4 = arith.cmpi sge, %0, %3 : vector<1x256xi32>
    %c1_i32 = arith.constant 1 : i32
    %5 = vector.broadcast %c1_i32 : i32 to vector<1x256xi32>
    %6 = arith.cmpi sge, %2, %5 : vector<1x256xi32>
    %7 = arith.andi %4, %6 : vector<1x256xi1>
    %c15_i32_0 = arith.constant 15 : i32
    %8 = vector.broadcast %c15_i32_0 : i32 to vector<1x256xi32>
    %9 = arith.cmpi slt, %2, %8 : vector<1x256xi32>
    %10 = arith.andi %4, %9 : vector<1x256xi1>
    %c1_i32_1 = arith.constant 1 : i32
    %11 = vector.broadcast %c1_i32_1 : i32 to vector<1x256xi32>
    %12 = arith.cmpi sge, %2, %11 : vector<1x256xi32>
    %c15_i32_2 = arith.constant 15 : i32
    %13 = vector.broadcast %c15_i32_2 : i32 to vector<1x256xi32>
    %14 = arith.cmpi slt, %2, %13 : vector<1x256xi32>
    %c240_i32 = arith.constant 240 : i32
    %15 = vector.broadcast %c240_i32 : i32 to vector<1x256xi32>
    %16 = arith.cmpi slt, %0, %15 : vector<1x256xi32>
    %c1_i32_3 = arith.constant 1 : i32
    %17 = vector.broadcast %c1_i32_3 : i32 to vector<1x256xi32>
    %18 = arith.cmpi sge, %2, %17 : vector<1x256xi32>
    %19 = arith.andi %16, %18 : vector<1x256xi1>
    %c15_i32_4 = arith.constant 15 : i32
    %20 = vector.broadcast %c15_i32_4 : i32 to vector<1x256xi32>
    %21 = arith.cmpi slt, %2, %20 : vector<1x256xi32>
    %22 = arith.andi %16, %21 : vector<1x256xi1>
    %c0 = arith.constant 0 : index
    %23 = memref.load %arg1[%c0] : memref<18xf32, #tpu.memory_space<smem>>
    %c1 = arith.constant 1 : index
    %24 = memref.load %arg1[%c1] : memref<18xf32, #tpu.memory_space<smem>>
    %c2 = arith.constant 2 : index
    %25 = memref.load %arg1[%c2] : memref<18xf32, #tpu.memory_space<smem>>
    %c3 = arith.constant 3 : index
    %26 = memref.load %arg1[%c3] : memref<18xf32, #tpu.memory_space<smem>>
    %c4 = arith.constant 4 : index
    %27 = memref.load %arg1[%c4] : memref<18xf32, #tpu.memory_space<smem>>
    %c5 = arith.constant 5 : index
    %28 = memref.load %arg1[%c5] : memref<18xf32, #tpu.memory_space<smem>>
    %c6 = arith.constant 6 : index
    %29 = memref.load %arg1[%c6] : memref<18xf32, #tpu.memory_space<smem>>
    %c7 = arith.constant 7 : index
    %30 = memref.load %arg1[%c7] : memref<18xf32, #tpu.memory_space<smem>>
    %c8 = arith.constant 8 : index
    %31 = memref.load %arg1[%c8] : memref<18xf32, #tpu.memory_space<smem>>
    %c9 = arith.constant 9 : index
    %32 = memref.load %arg1[%c9] : memref<18xf32, #tpu.memory_space<smem>>
    %c10 = arith.constant 10 : index
    %33 = memref.load %arg1[%c10] : memref<18xf32, #tpu.memory_space<smem>>
    %c11 = arith.constant 11 : index
    %34 = memref.load %arg1[%c11] : memref<18xf32, #tpu.memory_space<smem>>
    %c12 = arith.constant 12 : index
    %35 = memref.load %arg1[%c12] : memref<18xf32, #tpu.memory_space<smem>>
    %c13 = arith.constant 13 : index
    %36 = memref.load %arg1[%c13] : memref<18xf32, #tpu.memory_space<smem>>
    %c14 = arith.constant 14 : index
    %37 = memref.load %arg1[%c14] : memref<18xf32, #tpu.memory_space<smem>>
    %c15 = arith.constant 15 : index
    %38 = memref.load %arg1[%c15] : memref<18xf32, #tpu.memory_space<smem>>
    %c16 = arith.constant 16 : index
    %39 = memref.load %arg1[%c16] : memref<18xf32, #tpu.memory_space<smem>>
    %c17 = arith.constant 17 : index
    %40 = memref.load %arg1[%c17] : memref<18xf32, #tpu.memory_space<smem>>
    %c0_5 = arith.constant 0 : index
    %c0_6 = arith.constant 0 : index
    %c0_7 = arith.constant 0 : index
    %41 = vector.load %arg2[%c0_5, %c0_6, %c0_7] : memref<1x4x256xf32, #tpu.memory_space<vmem>>, vector<1x4x256xf32>
    %cst = arith.constant dense<0.000000e+00> : vector<1x256xf32>
    %42 = vector.multi_reduction <add>, %41, %cst [1] : vector<1x4x256xf32> to vector<1x256xf32>
    %cst_8 = arith.constant 4.000000e+00 : f32
    %43 = vector.broadcast %cst_8 : f32 to vector<1x256xf32>
    %44 = arith.divf %42, %43 : vector<1x256xf32>
    %cst_9 = arith.constant dense<0xFF800000> : vector<1x256xf32>
    %45 = vector.multi_reduction <maximumf>, %41, %cst_9 [1] : vector<1x4x256xf32> to vector<1x256xf32>
    %cst_10 = arith.constant 0.000000e+00 : f32
    %46 = vector.broadcast %cst_10 : f32 to vector<1x256xf32>
    %47 = vector.broadcast %23 : f32 to vector<1x256xf32>
    %48 = arith.mulf %47, %44 : vector<1x256xf32>
    %49 = vector.broadcast %32 : f32 to vector<1x256xf32>
    %50 = arith.mulf %49, %45 : vector<1x256xf32>
    %51 = arith.addf %48, %50 : vector<1x256xf32>
    %c17_i32 = arith.constant 17 : i32
    %52 = tpu.dynamic_rotate %51 by %c17_i32 dim 1 : vector<1x256xf32>, i32 -> vector<1x256xf32>
    %cst_11 = arith.constant 0.000000e+00 : f32
    %53 = vector.broadcast %cst_11 : f32 to vector<1x256xf32>
    %54 = arith.select %7, %52, %53 : vector<1x256xi1>, vector<1x256xf32>
    %55 = arith.addf %46, %54 : vector<1x256xf32>
    %56 = vector.broadcast %24 : f32 to vector<1x256xf32>
    %57 = arith.mulf %56, %44 : vector<1x256xf32>
    %58 = vector.broadcast %33 : f32 to vector<1x256xf32>
    %59 = arith.mulf %58, %45 : vector<1x256xf32>
    %60 = arith.addf %57, %59 : vector<1x256xf32>
    %c16_i32_12 = arith.constant 16 : i32
    %61 = tpu.dynamic_rotate %60 by %c16_i32_12 dim 1 : vector<1x256xf32>, i32 -> vector<1x256xf32>
    %cst_13 = arith.constant 0.000000e+00 : f32
    %62 = vector.broadcast %cst_13 : f32 to vector<1x256xf32>
    %63 = arith.select %4, %61, %62 : vector<1x256xi1>, vector<1x256xf32>
    %64 = arith.addf %55, %63 : vector<1x256xf32>
    %65 = vector.broadcast %25 : f32 to vector<1x256xf32>
    %66 = arith.mulf %65, %44 : vector<1x256xf32>
    %67 = vector.broadcast %34 : f32 to vector<1x256xf32>
    %68 = arith.mulf %67, %45 : vector<1x256xf32>
    %69 = arith.addf %66, %68 : vector<1x256xf32>
    %c15_i32_14 = arith.constant 15 : i32
    %70 = tpu.dynamic_rotate %69 by %c15_i32_14 dim 1 : vector<1x256xf32>, i32 -> vector<1x256xf32>
    %cst_15 = arith.constant 0.000000e+00 : f32
    %71 = vector.broadcast %cst_15 : f32 to vector<1x256xf32>
    %72 = arith.select %10, %70, %71 : vector<1x256xi1>, vector<1x256xf32>
    %73 = arith.addf %64, %72 : vector<1x256xf32>
    %74 = vector.broadcast %26 : f32 to vector<1x256xf32>
    %75 = arith.mulf %74, %44 : vector<1x256xf32>
    %76 = vector.broadcast %35 : f32 to vector<1x256xf32>
    %77 = arith.mulf %76, %45 : vector<1x256xf32>
    %78 = arith.addf %75, %77 : vector<1x256xf32>
    %c1_i32_16 = arith.constant 1 : i32
    %79 = tpu.dynamic_rotate %78 by %c1_i32_16 dim 1 : vector<1x256xf32>, i32 -> vector<1x256xf32>
    %cst_17 = arith.constant 0.000000e+00 : f32
    %80 = vector.broadcast %cst_17 : f32 to vector<1x256xf32>
    %81 = arith.select %12, %79, %80 : vector<1x256xi1>, vector<1x256xf32>
    %82 = arith.addf %73, %81 : vector<1x256xf32>
    %83 = vector.broadcast %27 : f32 to vector<1x256xf32>
    %84 = arith.mulf %83, %44 : vector<1x256xf32>
    %85 = vector.broadcast %36 : f32 to vector<1x256xf32>
    %86 = arith.mulf %85, %45 : vector<1x256xf32>
    %87 = arith.addf %84, %86 : vector<1x256xf32>
    %88 = arith.addf %82, %87 : vector<1x256xf32>
    %89 = vector.broadcast %28 : f32 to vector<1x256xf32>
    %90 = arith.mulf %89, %44 : vector<1x256xf32>
    %91 = vector.broadcast %37 : f32 to vector<1x256xf32>
    %92 = arith.mulf %91, %45 : vector<1x256xf32>
    %93 = arith.addf %90, %92 : vector<1x256xf32>
    %c255_i32 = arith.constant 255 : i32
    %94 = tpu.dynamic_rotate %93 by %c255_i32 dim 1 : vector<1x256xf32>, i32 -> vector<1x256xf32>
    %cst_18 = arith.constant 0.000000e+00 : f32
    %95 = vector.broadcast %cst_18 : f32 to vector<1x256xf32>
    %96 = arith.select %14, %94, %95 : vector<1x256xi1>, vector<1x256xf32>
    %97 = arith.addf %88, %96 : vector<1x256xf32>
    %98 = vector.broadcast %29 : f32 to vector<1x256xf32>
    %99 = arith.mulf %98, %44 : vector<1x256xf32>
    %100 = vector.broadcast %38 : f32 to vector<1x256xf32>
    %101 = arith.mulf %100, %45 : vector<1x256xf32>
    %102 = arith.addf %99, %101 : vector<1x256xf32>
    %c241_i32 = arith.constant 241 : i32
    %103 = tpu.dynamic_rotate %102 by %c241_i32 dim 1 : vector<1x256xf32>, i32 -> vector<1x256xf32>
    %cst_19 = arith.constant 0.000000e+00 : f32
    %104 = vector.broadcast %cst_19 : f32 to vector<1x256xf32>
    %105 = arith.select %19, %103, %104 : vector<1x256xi1>, vector<1x256xf32>
    %106 = arith.addf %97, %105 : vector<1x256xf32>
    %107 = vector.broadcast %30 : f32 to vector<1x256xf32>
    %108 = arith.mulf %107, %44 : vector<1x256xf32>
    %109 = vector.broadcast %39 : f32 to vector<1x256xf32>
    %110 = arith.mulf %109, %45 : vector<1x256xf32>
    %111 = arith.addf %108, %110 : vector<1x256xf32>
    %c240_i32_20 = arith.constant 240 : i32
    %112 = tpu.dynamic_rotate %111 by %c240_i32_20 dim 1 : vector<1x256xf32>, i32 -> vector<1x256xf32>
    %cst_21 = arith.constant 0.000000e+00 : f32
    %113 = vector.broadcast %cst_21 : f32 to vector<1x256xf32>
    %114 = arith.select %16, %112, %113 : vector<1x256xi1>, vector<1x256xf32>
    %115 = arith.addf %106, %114 : vector<1x256xf32>
    %116 = vector.broadcast %31 : f32 to vector<1x256xf32>
    %117 = arith.mulf %116, %44 : vector<1x256xf32>
    %118 = vector.broadcast %40 : f32 to vector<1x256xf32>
    %119 = arith.mulf %118, %45 : vector<1x256xf32>
    %120 = arith.addf %117, %119 : vector<1x256xf32>
    %c239_i32 = arith.constant 239 : i32
    %121 = tpu.dynamic_rotate %120 by %c239_i32 dim 1 : vector<1x256xf32>, i32 -> vector<1x256xf32>
    %cst_22 = arith.constant 0.000000e+00 : f32
    %122 = vector.broadcast %cst_22 : f32 to vector<1x256xf32>
    %123 = arith.select %22, %121, %122 : vector<1x256xi1>, vector<1x256xf32>
    %124 = arith.addf %115, %123 : vector<1x256xf32>
    %cst_23 = arith.constant 0.000000e+00 : f32
    %125 = vector.broadcast %cst_23 : f32 to vector<1x256xf32>
    %126 = arith.subf %125, %124 : vector<1x256xf32>
    %127 = math.exp %126 : vector<1x256xf32>
    %cst_24 = arith.constant 1.000000e+00 : f32
    %128 = vector.broadcast %cst_24 : f32 to vector<1x256xf32>
    %129 = arith.addf %128, %127 : vector<1x256xf32>
    %130 = tpu.reciprocal %129 {approx = true} : vector<1x256xf32> -> vector<1x256xf32>
    %131 = vector.shape_cast %130 : vector<1x256xf32> to vector<1x1x256xf32>
    %132 = vector.broadcast %131 : vector<1x1x256xf32> to vector<1x4x256xf32>
    %133 = arith.mulf %41, %132 : vector<1x4x256xf32>
    %c0_25 = arith.constant 0 : index
    %c0_26 = arith.constant 0 : index
    %c0_27 = arith.constant 0 : index
    %134 = vector.load %arg3[%c0_25, %c0_26, %c0_27] : memref<1x4x256xf32, #tpu.memory_space<vmem>>, vector<1x4x256xf32>
    tpu.vector_store %arg3[%c0_25, %c0_26, %c0_27], %133 {strides = array<i32>} : memref<1x4x256xf32, #tpu.memory_space<vmem>>, vector<1x4x256xf32>,
    return
  }
  func.func @transform_0(%arg0: i32) -> i32 {
    %c0_i32 = arith.constant 0 : i32
    %c0_i32_0 = arith.constant 0 : i32
    return %c0_i32 : i32
  }
  func.func @transform_1(%arg0: i32) -> (i32, i32, i32) {
    %c0_i32 = arith.constant 0 : i32
    %c0_i32_0 = arith.constant 0 : i32
    %c0_i32_1 = arith.constant 0 : i32
    return %arg0, %c0_i32, %c0_i32_0 : i32, i32, i32
  }
  func.func @transform_2(%arg0: i32) -> (i32, i32, i32) {
    %c0_i32 = arith.constant 0 : i32
    %c0_i32_0 = arith.constant 0 : i32
    %c0_i32_1 = arith.constant 0 : i32
    return %arg0, %c0_i32, %c0_i32_0 : i32, i32, i32
  }
}

</mosaic_0001>

<llo_original>
// kernel: tpu_custom_call.1
$region0: #{tpu_custom_call.1}
  #allocation0 [shape = 'u32[]', space=smem, size = 0x4, offset = 0x4, fixed_abs, tag = 'smem constant byte address 0x4 - core index']
  #allocation1 [shape = 'u32[144,128]{1,0:T(1,128)}', space=vmem, size = 0x12000, scoped, tag = 'internal scratch']
  %s0 = inlined_call_operand.hbm [shape: f32[18], index: 0, kind: input, shape index: {}]
  %s1 = inlined_call_operand.hbm [shape: f32[2,4,256], index: 1, kind: input, shape index: {}]
  %s2 = inlined_call_operand.hbm [shape: f32[2,4,256], index: 2, kind: output, shape index: {}]
  %s3 = sld [smem:[#allocation0]]
  $region49: #{tpu_custom_call.1} parent=0
    _
  %s5 = ssub.s32 1, %s3
  %s6 = scalar_select 0, %s5, %s3
  $region1: #{tpu_custom_call.1} parent=0
    #allocation2 [shape = 'u8[512]{0}', space=smem, size = 0x200, scoped, tag = 'input window, operand 0, single buffered']
    #allocation3 [shape = 's32[2]{0}', space=sflag, size = 0x8, scoped, tag = 'scoped memory for tpu_custom_call.1']
    #allocation4 [shape = 's32[2]{0}', space=sflag, size = 0x8, scoped, tag = 'scoped memory for tpu_custom_call.1']
    #allocation5 [shape = 's32[2]{0}', space=sflag, size = 0x8, scoped, tag = 'scoped memory for tpu_custom_call.1']
    #allocation6 [shape = 'u8[8192]{0}', space=vmem, size = 0x2000, scoped, tag = 'input window, operand 1']
    #allocation7 [shape = 'u8[8192]{0}', space=vmem, size = 0x2000, scoped, tag = 'output window, operand 0']
    %7 = vsyncpa [#allocation5], 0
    %8 = vsyncpa [#allocation3], 0
    %s9 = scalar_lea.sflag [#allocation3], 1
    %10 = vsyncpa %s9, 0
    %11 = vsyncpa [#allocation4], 0
    %s12 = scalar_lea.sflag [#allocation4], 1
    %13 = vsyncpa %s12, 0
    loop: start=0, step=1, limit=4
    $region2: #{tpu_custom_call.1} parent=1 // loop_pre_header
      _
    $region3: #{tpu_custom_call.1} parent=1 // loop_header
      %s15 = sphi 0, %s19
      %p16 = scmp.ge.s32.totalorder %s15, 4
      %s23 = sphi 0, %s23
      %s25 = sphi 0, %s23
      %s26 = sphi 0, %s25
      %s40 = sphi 0, %s26
      %s46 = sphi 0, %s48
      %s49 = sphi 0, %s46
      %s50 = sphi 0, %s49
      %s66 = sphi 0, %s50
      %s72 = sphi 0, %s74
      %s75 = sphi 0, %s72
      %s76 = sphi 0, %s75
      %s92 = sphi 0, %s76
    $region4: #{tpu_custom_call.1} parent=1 // loop_header_branch
      %18 = sbr.rel (%p16) target = $region8
    $region5: #{tpu_custom_call.1} parent=1 // loop_body
      %s20 = ssub.s32 %s15, 1
      %s21 = ssub.s32 %s15, 2
      %s22 = sadd.s32 %s15, 1
      %s24 = sadd.s32 %s23, 1
      %p27 = scmp.eq.s32.totalorder %s15, 1
      %p28 = scmp.ne.s32.totalorder %s23, %s25
      %p29 = scmp.eq.s32.totalorder %s15, 0
      %p30 = por %p28, %p29
      %p31 = scmp.ne.s32.totalorder %s23, %s25
      %p32 = scmp.eq.s32.totalorder %s20, 1
      %p33 = por %p31, %p32
      %p34 = scmp.ne.s32.totalorder %s25, %s26
      %p35 = scmp.eq.s32.totalorder %s20, 0
      %p36 = por %p34, %p35
      %p37 = scmp.ne.s32.totalorder %s25, %s26
      %p38 = scmp.eq.s32.totalorder %s21, 1
      %p39 = por %p37, %p38
      %p41 = scmp.ne.s32.totalorder %s26, %s40
      %p42 = scmp.eq.s32.totalorder %s21, 0
      %p43 = por %p41, %p42
      %s44 = ssub.s32 %s15, %s22
      %p45 = scmp.eq.s32.totalorder %s44, 0
      %s47 = sadd.s32 %s46, 1
      %s48 = scalar_select %p45, %s46, %s47
      %p51 = pneg %p45
      %p52 = scmp.eq.s32.totalorder %s15, 1
      %p53 = por %p51, %p52
      %p54 = scmp.ne.s32.totalorder %s46, %s49
      %p55 = scmp.eq.s32.totalorder %s15, 0
      %p56 = por %p54, %p55
      %p57 = scmp.ne.s32.totalorder %s46, %s49
      %p58 = scmp.eq.s32.totalorder %s20, 1
      %p59 = por %p57, %p58
      %p60 = scmp.ne.s32.totalorder %s49, %s50
      %p61 = scmp.eq.s32.totalorder %s20, 0
      %p62 = por %p60, %p61
      %p63 = scmp.ne.s32.totalorder %s49, %s50
      %p64 = scmp.eq.s32.totalorder %s21, 1
      %p65 = por %p63, %p64
      %p67 = scmp.ne.s32.totalorder %s50, %s66
      %p68 = scmp.eq.s32.totalorder %s21, 0
      %p69 = por %p67, %p68
      %s70 = ssub.s32 %s15, %s22
      %p71 = scmp.eq.s32.totalorder %s70, 0
      %s73 = sadd.s32 %s72, 1
      %s74 = scalar_select %p71, %s72, %s73
      %p77 = pneg %p71
      %p78 = scmp.eq.s32.totalorder %s15, 1
      %p79 = por %p77, %p78
      %p80 = scmp.ne.s32.totalorder %s72, %s75
      %p81 = scmp.eq.s32.totalorder %s15, 0
      %p82 = por %p80, %p81
      %p83 = scmp.ne.s32.totalorder %s72, %s75
      %p84 = scmp.eq.s32.totalorder %s20, 1
      %p85 = por %p83, %p84
      %p86 = scmp.ne.s32.totalorder %s75, %s76
      %p87 = scmp.eq.s32.totalorder %s20, 0
      %p88 = por %p86, %p87
      %p89 = scmp.ne.s32.totalorder %s75, %s76
      %p90 = scmp.eq.s32.totalorder %s21, 1
      %p91 = por %p89, %p90
      %p93 = scmp.ne.s32.totalorder %s76, %s92
      %p94 = scmp.eq.s32.totalorder %s21, 0
      %p95 = por %p93, %p94
      %p96 = scmp.le.s32.totalorder 1, %s15
      %p97 = scmp.lt.s32.totalorder %s15, 3
      %p98 = pnand %p96, %p97
      %p99 = pneg %p98
      // Predicated region
      $region9: #{tpu_custom_call.1} parent=5 // pred_check
        _
      $region10: #{tpu_custom_call.1} parent=5 // pred_check_branch
        %101 = sbr.rel (%p98) target = $region12
      $region11: #{tpu_custom_call.1} parent=5 // pred_region
        %s102 = ssub.s32 %s15, 1
        // Predicated region
        $region13: #{tpu_custom_call.1} parent=11 // pred_check
          %p103 = pneg %p36
        $region14: #{tpu_custom_call.1} parent=11 // pred_check_branch
          %105 = sbr.rel (%p103) target = $region16
        $region15: #{tpu_custom_call.1} parent=11 // pred_region
          %s107 = ssub.s32 16, 16
          %108 = vsyncadd [#allocation5], %s107
          %111 = dma.hbm_to_smem %s0, 16, [#allocation2], [#allocation5]
        $region16: #{tpu_custom_call.1} parent=11 // pred_fallthru
          _
      $region12: #{tpu_custom_call.1} parent=5 // pred_fallthru
        _
      %p112 = scmp.lt.s32.totalorder %s15, 2
      // Predicated region
      $region17: #{tpu_custom_call.1} parent=5 // pred_check
        %p113 = pneg %p112
      $region18: #{tpu_custom_call.1} parent=5 // pred_check_branch
        %115 = sbr.rel (%p113) target = $region20
      $region19: #{tpu_custom_call.1} parent=5 // pred_region
        // Predicated region
        $region21: #{tpu_custom_call.1} parent=19 // pred_check
          %p116 = pneg %p56
        $region22: #{tpu_custom_call.1} parent=19 // pred_check_branch
          %118 = sbr.rel (%p116) target = $region24
        $region23: #{tpu_custom_call.1} parent=19 // pred_region
          %s119 = sand.u32 %s46, 1
          %s120 = scalar_lea.sflag [#allocation3], %s119
          %s121 = sand.u32 %s46, 1
          %s122 = smul.addr %s121, 8
          %s123 = scalar_lea.vmem [#allocation6], %s122
          %s125 = ssub.s32 128, 128
          %126 = vsyncadd %s120, %s125
          %s127 = smul.addr %s15, 2
          %s128 = smul.addr %s127, 64
          %s129 = scalar_lea.hbm %s1, %s128
          %s131 = sshll.u32 %s123, 4
          %s132 = int_to_ptr.vmem [resolvable:$true] %s131
          %134 = dma.hbm_to_vmem [thread:$0]  %s129, 128, %s132, %s120
        $region24: #{tpu_custom_call.1} parent=19 // pred_fallthru
          _
      $region20: #{tpu_custom_call.1} parent=5 // pred_fallthru
        _
      %p135 = scmp.le.s32.totalorder 1, %s15
      %p136 = scmp.lt.s32.totalorder %s15, 3
      %p137 = pnand %p135, %p136
      %p138 = pneg %p137
      // Predicated region
      $region25: #{tpu_custom_call.1} parent=5 // pred_check
        _
      $region26: #{tpu_custom_call.1} parent=5 // pred_check_branch
        %140 = sbr.rel (%p137) target = $region28
      $region27: #{tpu_custom_call.1} parent=5 // pred_region
        %s141 = ssub.s32 %s15, 1
        // Predicated region
        $region29: #{tpu_custom_call.1} parent=27 // pred_check
          %p142 = pneg %p36
        $region30: #{tpu_custom_call.1} parent=27 // pred_check_branch
          %144 = sbr.rel (%p142) target = $region32
        $region31: #{tpu_custom_call.1} parent=27 // pred_region
          %145 = dma.done [#allocation5], 16
        $region32: #{tpu_custom_call.1} parent=27 // pred_fallthru
          _
        %s146 = sand.u32 %s49, 1
        %s147 = scalar_lea.sflag [#allocation3], %s146
        %s148 = sand.u32 %s49, 1
        %s149 = smul.addr %s148, 8
        %s150 = scalar_lea.vmem [#allocation6], %s149
        // Predicated region
        $region33: #{tpu_custom_call.1} parent=27 // pred_check
          %p151 = pneg %p62
        $region34: #{tpu_custom_call.1} parent=27 // pred_check_branch
          %153 = sbr.rel (%p151) target = $region36
        $region35: #{tpu_custom_call.1} parent=27 // pred_region
          %154 = dma.done %s147, 128
        $region36: #{tpu_custom_call.1} parent=27 // pred_fallthru
          _
        %155 = sfence
        %p156 = pneg %p36
        %p157 = pneg %p33
        %s158 = sand.u32 %s49, 1
        %s159 = scalar_lea.sflag [#allocation3], %s158
        %s160 = sand.u32 %s49, 1
        %s161 = smul.addr %s160, 8
        %s162 = scalar_lea.vmem [#allocation6], %s161
        %p163 = pneg %p62
        %p164 = pneg %p59
        %p165 = pneg %p88
        %p166 = pneg %p85
        %s167 = sand.u32 %s75, 1
        %s168 = scalar_lea.sflag [#allocation4], %s167
        %s169 = sand.u32 %s75, 1
        %s170 = smul.addr %s169, 8
        %s171 = scalar_lea.vmem [#allocation7], %s170
        %v172 = vlaneseq
        %v173 = vand.u32 %v172, 127
        %v174 = vadd.s32 %v173, 128
        %v175 = vand.u32 %v173, 15
        %v176 = vand.u32 %v174, 15
        %vm177 = vcmp.ge.s32.totalorder %v173, 16
        %vm178 = vcmp.ge.s32.totalorder %v174, 16
        %vm179 = vcmp.ge.s32.totalorder %v175, 1
        %vm180 = vcmp.ge.s32.totalorder %v176, 1
        %vm181 = vmand %vm177, %vm179
        %vm182 = vmand %vm178, %vm180
        %vm183 = vcmp.lt.s32.totalorder %v175, 15
        %vm184 = vcmp.lt.s32.totalorder %v176, 15
        %vm185 = vmand %vm177, %vm183
        %vm186 = vmand %vm178, %vm184
        %vm187 = vcmp.lt.s32.totalorder %v173, 240
        %vm188 = vcmp.lt.s32.totalorder %v174, 240
        %vm189 = vmand %vm187, %vm179
        %vm190 = vmand %vm188, %vm180
        %vm191 = vmand %vm187, %vm183
        %vm192 = vmand %vm188, %vm184
        %s193 = sld [smem:[#allocation2]]
        %s194 = sld [smem:[#allocation2 + $0x1]]
        %s195 = sld [smem:[#allocation2 + $0x2]]
        %s196 = sld [smem:[#allocation2 + $0x3]]
        %s197 = sld [smem:[#allocation2 + $0x4]]
        %s198 = sld [smem:[#allocation2 + $0x5]]
        %s199 = sld [smem:[#allocation2 + $0x6]]
        %s200 = sld [smem:[#allocation2 + $0x7]]
        %s201 = sld [smem:[#allocation2 + $0x8]]
        %s202 = sld [smem:[#allocation2 + $0x9]]
        %s203 = sld [smem:[#allocation2 + $0xa]]
        %s204 = sld [smem:[#allocation2 + $0xb]]
        %s205 = sld [smem:[#allocation2 + $0xc]]
        %s206 = sld [smem:[#allocation2 + $0xd]]
        %s207 = sld [smem:[#allocation2 + $0xe]]
        %s208 = sld [smem:[#allocation2 + $0xf]]
        %s209 = sld [smem:[#allocation2 + $0x10]]
        %s210 = sld [smem:[#allocation2 + $0x11]]
        %v211 = vld [vmem:[%s150] sm:$0xff]
        %v213 = vcombine.high %v211, %v211
        %vm215 = vcmask 1043456
        %v216 = vsel %vm215, %v211, 0.0
        %v217 = vrot.slane %v216, 4
        %v218 = vadd.f32 %v216, %v217
        %v219 = vrot.slane %v218, 2
        %v220 = vadd.f32 %v218, %v219
        %v221 = vrot.slane %v220, 1
        %v222 = vadd.f32 %v220, %v221
        %v223 = vsel %vm215, %v213, 0.0
        %v224 = vrot.slane %v223, 4
        %v225 = vadd.f32 %v223, %v224
        %v226 = vrot.slane %v225, 2
        %v227 = vadd.f32 %v225, %v226
        %v228 = vrot.slane %v227, 1
        %v229 = vadd.f32 %v227, %v228
        %v230 = vrcp.pop 4.0
        %v231 = vmul.f32 %v222, %v230
        %v232 = vmul.f32 %v229, %v230
        %v233 = vsel %vm215, %v211, -inf
        %v234 = vrot.slane %v233, 4
        %v235 = vmax.f32 %v233, %v234
        %v236 = vrot.slane %v235, 2
        %v237 = vmax.f32 %v235, %v236
        %v238 = vrot.slane %v237, 1
        %v239 = vmax.f32 %v237, %v238
        %v240 = vsel %vm215, %v213, -inf
        %v241 = vrot.slane %v240, 4
        %v242 = vmax.f32 %v240, %v241
        %v243 = vrot.slane %v242, 2
        %v244 = vmax.f32 %v242, %v243
        %v245 = vrot.slane %v244, 1
        %v246 = vmax.f32 %v244, %v245
        %v247 = vstv %s193
        %v248 = vmul.f32 %v247, %v231
        %v249 = vmul.f32 %v247, %v232
        %v250 = vstv %s202
        %v251 = vmul.f32 %v250, %v239
        %v252 = vmul.f32 %v250, %v246
        %v253 = vadd.f32 %v248, %v251
        %v254 = vadd.f32 %v249, %v252
        %255 = vrot.lane.b32.xlu0 %v253, 17
        %v256 = vpop.permute.xlu0 %255
        %257 = vrot.lane.b32.xlu0 %v254, 17
        %v258 = vpop.permute.xlu0 %257
        %vm259 = vcmp.lt.s32.totalorder %v173, 17
        %v260 = vsel %vm259, %v256, %v258
        %v261 = vsel %vm259, %v258, %v256
        %v262 = vsel %vm181, %v261, 0.0
        %v263 = vsel %vm182, %v260, 0.0
        %v264 = vadd.f32 %v262, 0.0
        %v265 = vadd.f32 %v263, 0.0
        %v266 = vstv %s194
        %v267 = vmul.f32 %v266, %v231
        %v268 = vmul.f32 %v266, %v232
        %v269 = vstv %s203
        %v270 = vmul.f32 %v269, %v239
        %v271 = vmul.f32 %v269, %v246
        %v272 = vadd.f32 %v267, %v270
        %v273 = vadd.f32 %v268, %v271
        %274 = vrot.lane.b32.xlu0 %v272, 16
        %v275 = vpop.permute.xlu0 %274
        %276 = vrot.lane.b32.xlu0 %v273, 16
        %v277 = vpop.permute.xlu0 %276
        %vm278 = vcmp.lt.s32.totalorder %v173, 16
        %v279 = vsel %vm278, %v275, %v277
        %v280 = vsel %vm278, %v277, %v275
        %v281 = vsel %vm177, %v280, 0.0
        %v282 = vsel %vm178, %v279, 0.0
        %v283 = vadd.f32 %v264, %v281
        %v284 = vadd.f32 %v265, %v282
        %v285 = vstv %s195
        %v286 = vmul.f32 %v285, %v231
        %v287 = vmul.f32 %v285, %v232
        %v288 = vstv %s204
        %v289 = vmul.f32 %v288, %v239
        %v290 = vmul.f32 %v288, %v246
        %v291 = vadd.f32 %v286, %v289
        %v292 = vadd.f32 %v287, %v290
        %293 = vrot.lane.b32.xlu0 %v291, 15
        %v294 = vpop.permute.xlu0 %293
        %295 = vrot.lane.b32.xlu0 %v292, 15
        %v296 = vpop.permute.xlu0 %295
        %vm297 = vcmp.lt.s32.totalorder %v173, 15
        %v298 = vsel %vm297, %v294, %v296
        %v299 = vsel %vm297, %v296, %v294
        %v300 = vsel %vm185, %v299, 0.0
        %v301 = vsel %vm186, %v298, 0.0
        %v302 = vadd.f32 %v283, %v300
        %v303 = vadd.f32 %v284, %v301
        %v304 = vstv %s196
        %v305 = vmul.f32 %v304, %v231
        %v306 = vmul.f32 %v304, %v232
        %v307 = vstv %s205
        %v308 = vmul.f32 %v307, %v239
        %v309 = vmul.f32 %v307, %v246
        %v310 = vadd.f32 %v305, %v308
        %v311 = vadd.f32 %v306, %v309
        %312 = vrot.lane.b32.xlu0 %v310, 1
        %v313 = vpop.permute.xlu0 %312
        %314 = vrot.lane.b32.xlu0 %v311, 1
        %v315 = vpop.permute.xlu0 %314
        %vm316 = vcmp.lt.s32.totalorder %v173, 1
        %v317 = vsel %vm316, %v313, %v315
        %v318 = vsel %vm316, %v315, %v313
        %v319 = vsel %vm179, %v318, 0.0
        %v320 = vsel %vm180, %v317, 0.0
        %v321 = vadd.f32 %v302, %v319
        %v322 = vadd.f32 %v303, %v320
        %v323 = vstv %s197
        %v324 = vmul.f32 %v323, %v231
        %v325 = vmul.f32 %v323, %v232
        %v326 = vstv %s206
        %v327 = vmul.f32 %v326, %v239
        %v328 = vmul.f32 %v326, %v246
        %v329 = vadd.f32 %v324, %v327
        %v330 = vadd.f32 %v325, %v328
        %v331 = vadd.f32 %v321, %v329
        %v332 = vadd.f32 %v322, %v330
        %v333 = vstv %s198
        %v334 = vmul.f32 %v333, %v231
        %v335 = vmul.f32 %v333, %v232
        %v336 = vstv %s207
        %v337 = vmul.f32 %v336, %v239
        %v338 = vmul.f32 %v336, %v246
        %v339 = vadd.f32 %v334, %v337
        %v340 = vadd.f32 %v335, %v338
        %341 = vrot.lane.b32.xlu0 %v339, 127
        %v342 = vpop.permute.xlu0 %341
        %343 = vrot.lane.b32.xlu0 %v340, 127
        %v344 = vpop.permute.xlu0 %343
        %vm345 = vcmp.lt.s32.totalorder %v173, 127
        %v346 = vsel %vm345, %v342, %v344
        %v347 = vsel %vm345, %v344, %v342
        %v348 = vsel %vm183, %v346, 0.0
        %v349 = vsel %vm184, %v347, 0.0
        %v350 = vadd.f32 %v331, %v348
        %v351 = vadd.f32 %v332, %v349
        %v352 = vstv %s199
        %v353 = vmul.f32 %v352, %v231
        %v354 = vmul.f32 %v352, %v232
        %v355 = vstv %s208
        %v356 = vmul.f32 %v355, %v239
        %v357 = vmul.f32 %v355, %v246
        %v358 = vadd.f32 %v353, %v356
        %v359 = vadd.f32 %v354, %v357
        %360 = vrot.lane.b32.xlu0 %v358, 113
        %v361 = vpop.permute.xlu0 %360
        %362 = vrot.lane.b32.xlu0 %v359, 113
        %v363 = vpop.permute.xlu0 %362
        %vm364 = vcmp.lt.s32.totalorder %v173, 113
        %v365 = vsel %vm364, %v361, %v363
        %v366 = vsel %vm364, %v363, %v361
        %v367 = vsel %vm189, %v365, 0.0
        %v368 = vsel %vm190, %v366, 0.0
        %v369 = vadd.f32 %v350, %v367
        %v370 = vadd.f32 %v351, %v368
        %v371 = vstv %s200
        %v372 = vmul.f32 %v371, %v231
        %v373 = vmul.f32 %v371, %v232
        %v374 = vstv %s209
        %v375 = vmul.f32 %v374, %v239
        %v376 = vmul.f32 %v374, %v246
        %v377 = vadd.f32 %v372, %v375
        %v378 = vadd.f32 %v373, %v376
        %379 = vrot.lane.b32.xlu0 %v377, 112
        %v380 = vpop.permute.xlu0 %379
        %381 = vrot.lane.b32.xlu0 %v378, 112
        %v382 = vpop.permute.xlu0 %381
        %vm383 = vcmp.lt.s32.totalorder %v173, 112
        %v384 = vsel %vm383, %v380, %v382
        %v385 = vsel %vm383, %v382, %v380
        %v386 = vsel %vm187, %v384, 0.0
        %v387 = vsel %vm188, %v385, 0.0
        %v388 = vadd.f32 %v369, %v386
        %v389 = vadd.f32 %v370, %v387
        %v390 = vstv %s201
        %v391 = vmul.f32 %v390, %v231
        %v392 = vmul.f32 %v390, %v232
        %v393 = vstv %s210
        %v394 = vmul.f32 %v393, %v239
        %v395 = vmul.f32 %v393, %v246
        %v396 = vadd.f32 %v391, %v394
        %v397 = vadd.f32 %v392, %v395
        %398 = vrot.lane.b32.xlu0 %v396, 111
        %v399 = vpop.permute.xlu0 %398
        %400 = vrot.lane.b32.xlu0 %v397, 111
        %v401 = vpop.permute.xlu0 %400
        %vm402 = vcmp.lt.s32.totalorder %v173, 111
        %v403 = vsel %vm402, %v399, %v401
        %v404 = vsel %vm402, %v401, %v399
        %v405 = vsel %vm191, %v403, 0.0
        %v406 = vsel %vm192, %v404, 0.0
        %v407 = vadd.f32 %v388, %v405
        %v408 = vadd.f32 %v389, %v406
        %v409 = vsub.f32 0.0, %v407
        %v410 = vsub.f32 0.0, %v408
        %v411 = vmul.f32 %v409, 1.442695
        %v412 = vpow.pop %v411
        %v413 = vmul.f32 %v410, 1.442695
        %v414 = vpow.pop %v413
        %v415 = vadd.f32 %v412, 1.0
        %v416 = vadd.f32 %v414, 1.0
        %v417 = vrcp.pop %v415
        %v418 = vrcp.pop %v416
        %v419 = vlaneseq
        %v420 = vshrl.u32 %v419, 7
        %v421 = vsub.s32 0, %v420
        %v422 = vrot.slane %v417, %v421
        %v423 = vlaneseq
        %v424 = vshrl.u32 %v423, 7
        %v425 = vsub.s32 0, %v424
        %v426 = vrot.slane %v418, %v425
        %v429 = vcombine.low %v422, %v426
        %v431 = vmul.f32 %v211, %v429
        %432 = vst [vmem:[%s171] sm:$0xff] %v431
        %s433 = sand.u32 %s75, 1
        %s434 = scalar_lea.sflag [#allocation4], %s433
        %s435 = sand.u32 %s75, 1
        %s436 = smul.addr %s435, 8
        %s437 = scalar_lea.vmem [#allocation7], %s436
        // Predicated region
        $region37: #{tpu_custom_call.1} parent=27 // pred_check
          %p438 = pneg %p85
        $region38: #{tpu_custom_call.1} parent=27 // pred_check_branch
          %440 = sbr.rel (%p438) target = $region40
        $region39: #{tpu_custom_call.1} parent=27 // pred_region
          %s442 = ssub.s32 128, 128
          %443 = vsyncadd %s434, %s442
          %s444 = smul.addr %s20, 2
          %s445 = smul.addr %s444, 64
          %s446 = scalar_lea.hbm %s2, %s445
          %s448 = sshll.u32 %s437, 4
          %s449 = int_to_ptr.vmem [resolvable:$true] %s448
          %451 = dma.vmem_to_hbm [thread:$0]  %s449, 128, %s446, %s434
        $region40: #{tpu_custom_call.1} parent=27 // pred_fallthru
          _
      $region28: #{tpu_custom_call.1} parent=5 // pred_fallthru
        _
      %p452 = scmp.le.s32.totalorder 2, %s15
      // Predicated region
      $region41: #{tpu_custom_call.1} parent=5 // pred_check
        %p453 = pneg %p452
      $region42: #{tpu_custom_call.1} parent=5 // pred_check_branch
        %455 = sbr.rel (%p453) target = $region44
      $region43: #{tpu_custom_call.1} parent=5 // pred_region
        %s456 = ssub.s32 %s15, 2
        // Predicated region
        $region45: #{tpu_custom_call.1} parent=43 // pred_check
          %p457 = pneg %p91
        $region46: #{tpu_custom_call.1} parent=43 // pred_check_branch
          %459 = sbr.rel (%p457) target = $region48
        $region47: #{tpu_custom_call.1} parent=43 // pred_region
          %s460 = sand.u32 %s76, 1
          %s461 = scalar_lea.sflag [#allocation4], %s460
          %s462 = sand.u32 %s76, 1
          %s463 = smul.addr %s462, 8
          %s464 = scalar_lea.vmem [#allocation7], %s463
          %465 = dma.done %s461, 128
        $region48: #{tpu_custom_call.1} parent=43 // pred_fallthru
          _
      $region44: #{tpu_custom_call.1} parent=5 // pred_fallthru
        _
    $region6: #{tpu_custom_call.1} parent=1 // loop_footer
      %s19 = sadd.s32 1, %s15
    $region7: #{tpu_custom_call.1} parent=1 // loop_footer_branch
      %14 = sbr.rel target = $region3
    $region8: #{tpu_custom_call.1} parent=1 // loop_exit
      _
    %466 = vsyncpa [#allocation3], 1
    %s467 = scalar_lea.sflag [#allocation3], 1
    %468 = vsyncpa %s467, 1
    %469 = vsyncpa [#allocation4], 1
    %s470 = scalar_lea.sflag [#allocation4], 1
    %471 = vsyncpa %s470, 1
    %472 = vsyncpa [#allocation5], 1
    %s473 = scalar_lea.sflag [#allocation5], 1
    %474 = vsyncpa %s473, 1

</llo_original>
